<compile_context>
chip_gen: v5e
topology: v5e:2x2
jax: 0.10.0
libtpu: 0.0.40
codegen_flags: <defaults>
</compile_context>

<pallas_src>
import jax
import jax.numpy as jnp
from jax.experimental import pallas as pl
from jax.experimental.pallas import tpu as pltpu

LANE = 128
SUBLANE = 8


def _round_up(x, m):
    return ((x + m - 1) // m) * m


def mlp_kernel(x_ref, w1_ref, b1_ref, w2_ref, b2_ref, w3_ref, b3_ref, o_ref):
    # Cast x to the compute (weight) dtype only after the load -> no wrapper
    # cast pass over x in HBM.  For the f32 path this is a no-op.
    x = x_ref[...].astype(w1_ref.dtype)
    # layer1 + ReLU (f32 accumulation on the MXU; bias/ReLU in f32)
    h1 = jnp.dot(x, w1_ref[...], preferred_element_type=jnp.float32)
    h1 = jnp.maximum(h1 + b1_ref[...], 0.0).astype(w2_ref.dtype)
    # layer2 + ReLU
    h2 = jnp.dot(h1, w2_ref[...], preferred_element_type=jnp.float32)
    h2 = jnp.maximum(h2 + b2_ref[...], 0.0).astype(w3_ref.dtype)
    # layer3 (no activation)
    out = jnp.dot(h2, w3_ref[...], preferred_element_type=jnp.float32) + b3_ref[...]
    o_ref[...] = out.astype(o_ref.dtype)


def pack_params(params, compute_dtype=jnp.float32):
    """Pad the hidden dim to 128 lanes and cast the weights ONCE (reused across
    calls).  Padding is exactly neutral: padded weight rows/cols and bias slots
    are zero and relu(0) == 0.  Biases stay f32 (accumulator dtype)."""
    w1, b1 = params["w1"], params["b1"]
    w2, b2 = params["w2"], params["b2"]
    w3, b3 = params["w3"], params["b3"]
    d_in, h = w1.shape
    d_out = w3.shape[1]
    hp = _round_up(h, LANE)
    cdt = compute_dtype
    w1p = jnp.zeros((d_in, hp), cdt).at[:, :h].set(w1.astype(cdt))
    w2p = jnp.zeros((hp, hp), cdt).at[:h, :h].set(w2.astype(cdt))
    w3p = jnp.zeros((hp, d_out), cdt).at[:h, :].set(w3.astype(cdt))
    b1p = jnp.zeros((1, hp), jnp.float32).at[:, :h].set(b1.astype(jnp.float32).reshape(1, h))
    b2p = jnp.zeros((1, hp), jnp.float32).at[:, :h].set(b2.astype(jnp.float32).reshape(1, h))
    b3p = b3.astype(jnp.float32).reshape(1, d_out)
    return {"w1": w1p, "b1": b1p, "w2": w2p, "b2": b2p, "w3": w3p, "b3": b3p}


def net_forward(x, packed, *, tile_n=2048, out_dtype=None):
    """x: [N, D_in] (any float dtype); packed: output of pack_params()."""
    n, d_in = x.shape
    w1p, b1p = packed["w1"], packed["b1"]
    w2p, b2p = packed["w2"], packed["b2"]
    w3p, b3p = packed["w3"], packed["b3"]
    assert w1p.shape[0] == d_in
    d_out = w3p.shape[1]
    out_dtype = out_dtype or x.dtype

    if n <= tile_n:
        # Single block equal to the full batch dim: legal for any n (no padding).
        tile_n = n
    else:
        tile_n = _round_up(tile_n, SUBLANE)
    grid = (pl.cdiv(n, tile_n),)
    # If tile_n does not divide n, the last block's OOB input rows are
    # unspecified (row-local garbage) and their output stores are clipped by
    # Pallas, so no batch padding of x / the output is needed.

    # Weights/biases: same block every grid step -> stay VMEM-resident.
    def resident(shape):
        return pl.BlockSpec(shape, lambda i: tuple(0 for _ in shape))

    return pl.pallas_call(
        mlp_kernel,
        out_shape=jax.ShapeDtypeStruct((n, d_out), out_dtype),
        grid_spec=pltpu.PrefetchScalarGridSpec(
            num_scalar_prefetch=0,
            grid=grid,
            in_specs=[
                pl.BlockSpec((tile_n, d_in), lambda i: (i, 0)),   # x row tile
                resident(w1p.shape), resident(b1p.shape),          # layer1
                resident(w2p.shape), resident(b2p.shape),          # layer2
                resident(w3p.shape), resident(b3p.shape),          # layer3
            ],
            out_specs=pl.BlockSpec((tile_n, d_out), lambda i: (i, 0)),
        ),
        compiler_params=pltpu.CompilerParams(
            dimension_semantics=("parallel",),        # row tiles independent (v7x: 2 TCs)
            vmem_limit_bytes=32 * 1024 * 1024,        # safe on v7x's smaller VMEM
        ),
    )(x, w1p, b1p, w2p, b2p, w3p, b3p)


def init_params(key, n_input, n_hidden, n_output):
    """Deterministic init mimicking torch.nn.Linear's U(-1/sqrt(fan_in), 1/sqrt(fan_in)).
    Weights stored (in, out) == W^T, so forward is x @ w + b (same semantics)."""
    def linear(key, fan_in, fan_out):
        kw, kb = jax.random.split(key)
        bound = 1.0 / jnp.sqrt(jnp.float32(fan_in))
        w = jax.random.uniform(kw, (fan_in, fan_out), jnp.float32, -bound, bound)
        b = jax.random.uniform(kb, (1, fan_out), jnp.float32, -bound, bound)
        return w, b

    k1, k2, k3 = jax.random.split(key, 3)
    w1, b1 = linear(k1, n_input, n_hidden)
    w2, b2 = linear(k2, n_hidden, n_hidden)
    w3, b3 = linear(k3, n_hidden, n_output)
    return {"w1": w1, "b1": b1, "w2": w2, "b2": b2, "w3": w3, "b3": b3}


def net_ref(x, p):
    h1 = jnp.maximum(x @ p["w1"] + p["b1"], 0.0)
    h2 = jnp.maximum(h1 @ p["w2"] + p["b2"], 0.0)
    return h2 @ p["w3"] + p["b3"]


if __name__ == "__main__":
    # Module implies Net(D_in=50, n_hidden, n_output); small sizes for the test.
    N, D_in, H, D_out = 8, 50, 32, 50

    key = jax.random.PRNGKey(0)
    kx, kp, kx2 = jax.random.split(key, 3)
    x = jax.random.uniform(kx, (N, D_in), jnp.float32, -10.0, 10.0)
    params = init_params(kp, D_in, H, D_out)

    ref = net_ref(x, params)

    # f32 path: pack weights once, must match the reference tightly.
    packed_f32 = pack_params(params, jnp.float32)
    out = jax.block_until_ready(net_forward(x, packed_f32))
    assert out.shape == (N, D_out) and out.dtype == x.dtype
    assert jnp.allclose(out, ref, atol=1e-4, rtol=1e-4)

    # bf16-weight / f32-accumulate path (v5e MXU lever); x stays f32 in HBM.
    packed_bf16 = pack_params(params, jnp.bfloat16)
    out_bf16 = jax.block_until_ready(net_forward(x, packed_bf16))
    assert out_bf16.shape == (N, D_out)
    assert jnp.allclose(out_bf16, ref, atol=1.0, rtol=1e-1)

    # Multi-tile path: exercises >=2 grid steps (both v7x TCs), resident
    # weights, and the clipped last partial block (2056 = 2*1024 + 8).
    N2 = 2056
    x2 = jax.random.uniform(kx2, (N2, D_in), jnp.float32, -10.0, 10.0)
    out2 = jax.block_until_ready(net_forward(x2, packed_f32, tile_n=1024))
    assert out2.shape == (N2, D_out)
    assert jnp.allclose(out2, net_ref(x2, params), atol=1e-3, rtol=1e-4)

    print("KERNEL_OK")
</pallas_src>

<mosaic_0001>
module attributes {stable_mosaic.version = 11 : i64} {
  func.func @mlp_kernel(%arg0: i32, %arg1: memref<8x50xf32, #tpu.memory_space<vmem>>, %arg2: memref<50x128xf32, #tpu.memory_space<vmem>>, %arg3: memref<1x128xf32, #tpu.memory_space<vmem>>, %arg4: memref<128x128xf32, #tpu.memory_space<vmem>>, %arg5: memref<1x128xf32, #tpu.memory_space<vmem>>, %arg6: memref<128x50xf32, #tpu.memory_space<vmem>>, %arg7: memref<1x50xf32, #tpu.memory_space<vmem>>, %arg8: memref<8x50xf32, #tpu.memory_space<vmem>>) attributes {dimension_semantics = [#tpu.dimension_semantics<parallel>], iteration_bounds = array<i64: 1>, scalar_prefetch = 0 : i64, scratch_operands = 0 : i64, tpu.core_type = #tpu.core_type<tc>, window_params = [{transform_indices = @transform_0, window_bounds = array<i64: 8, 50>}, {pipeline_mode = #tpu.pipeline_mode<synchronous>, transform_indices = @transform_1, window_bounds = array<i64: 50, 128>}, {pipeline_mode = #tpu.pipeline_mode<synchronous>, transform_indices = @transform_2, window_bounds = array<i64: 1, 128>}, {pipeline_mode = #tpu.pipeline_mode<synchronous>, transform_indices = @transform_3, window_bounds = array<i64: 128, 128>}, {pipeline_mode = #tpu.pipeline_mode<synchronous>, transform_indices = @transform_4, window_bounds = array<i64: 1, 128>}, {pipeline_mode = #tpu.pipeline_mode<synchronous>, transform_indices = @transform_5, window_bounds = array<i64: 128, 50>}, {pipeline_mode = #tpu.pipeline_mode<synchronous>, transform_indices = @transform_6, window_bounds = array<i64: 1, 50>}, {transform_indices = @transform_7, window_bounds = array<i64: 8, 50>}]} {
    %c0 = arith.constant 0 : index
    %c0_0 = arith.constant 0 : index
    %0 = vector.load %arg1[%c0, %c0_0] : memref<8x50xf32, #tpu.memory_space<vmem>>, vector<8x50xf32>
    %c0_1 = arith.constant 0 : index
    %c0_2 = arith.constant 0 : index
    %1 = vector.load %arg2[%c0_1, %c0_2] : memref<50x128xf32, #tpu.memory_space<vmem>>, vector<50x128xf32>
    %cst = arith.constant dense<0.000000e+00> : vector<8x128xf32>
    %2 = tpu.matmul %0, %1, %cst {dimension_numbers = #tpu.dot_dimension_numbers<[1], [0], [0], [1], [0, 0, 1, 1], [], []>} : vector<8x50xf32>, vector<50x128xf32>, vector<8x128xf32> -> vector<8x128xf32>
    %c0_3 = arith.constant 0 : index
    %c0_4 = arith.constant 0 : index
    %3 = vector.load %arg3[%c0_3, %c0_4] : memref<1x128xf32, #tpu.memory_space<vmem>>, vector<1x128xf32>
    %4 = vector.broadcast %3 : vector<1x128xf32> to vector<8x128xf32>
    %5 = arith.addf %2, %4 : vector<8x128xf32>
    %cst_5 = arith.constant 0.000000e+00 : f32
    %6 = vector.broadcast %cst_5 : f32 to vector<8x128xf32>
    %7 = arith.maximumf %5, %6 : vector<8x128xf32>
    %c0_6 = arith.constant 0 : index
    %c0_7 = arith.constant 0 : index
    %8 = vector.load %arg4[%c0_6, %c0_7] : memref<128x128xf32, #tpu.memory_space<vmem>>, vector<128x128xf32>
    %cst_8 = arith.constant dense<0.000000e+00> : vector<8x128xf32>
    %9 = tpu.matmul %7, %8, %cst_8 {dimension_numbers = #tpu.dot_dimension_numbers<[1], [0], [0], [1], [0, 0, 1, 1], [], []>} : vector<8x128xf32>, vector<128x128xf32>, vector<8x128xf32> -> vector<8x128xf32>
    %c0_9 = arith.constant 0 : index
    %c0_10 = arith.constant 0 : index
    %10 = vector.load %arg5[%c0_9, %c0_10] : memref<1x128xf32, #tpu.memory_space<vmem>>, vector<1x128xf32>
    %11 = vector.broadcast %10 : vector<1x128xf32> to vector<8x128xf32>
    %12 = arith.addf %9, %11 : vector<8x128xf32>
    %cst_11 = arith.constant 0.000000e+00 : f32
    %13 = vector.broadcast %cst_11 : f32 to vector<8x128xf32>
    %14 = arith.maximumf %12, %13 : vector<8x128xf32>
    %c0_12 = arith.constant 0 : index
    %c0_13 = arith.constant 0 : index
    %15 = vector.load %arg6[%c0_12, %c0_13] : memref<128x50xf32, #tpu.memory_space<vmem>>, vector<128x50xf32>
    %cst_14 = arith.constant dense<0.000000e+00> : vector<8x50xf32>
    %16 = tpu.matmul %14, %15, %cst_14 {dimension_numbers = #tpu.dot_dimension_numbers<[1], [0], [0], [1], [0, 0, 1, 1], [], []>} : vector<8x128xf32>, vector<128x50xf32>, vector<8x50xf32> -> vector<8x50xf32>
    %c0_15 = arith.constant 0 : index
    %c0_16 = arith.constant 0 : index
    %17 = vector.load %arg7[%c0_15, %c0_16] : memref<1x50xf32, #tpu.memory_space<vmem>>, vector<1x50xf32>
    %18 = vector.broadcast %17 : vector<1x50xf32> to vector<8x50xf32>
    %19 = arith.addf %16, %18 : vector<8x50xf32>
    %c0_17 = arith.constant 0 : index
    %c0_18 = arith.constant 0 : index
    %20 = vector.load %arg8[%c0_17, %c0_18] : memref<8x50xf32, #tpu.memory_space<vmem>>, vector<8x50xf32>
    tpu.vector_store %arg8[%c0_17, %c0_18], %19 {strides = array<i32>} : memref<8x50xf32, #tpu.memory_space<vmem>>, vector<8x50xf32>,
    return
  }
  func.func @transform_0(%arg0: i32) -> (i32, i32) {
    %c0_i32 = arith.constant 0 : i32
    %c0_i32_0 = arith.constant 0 : i32
    return %arg0, %c0_i32 : i32, i32
  }
  func.func @transform_1(%arg0: i32) -> (i32, i32) {
    %c0_i32 = arith.constant 0 : i32
    %c0_i32_0 = arith.constant 0 : i32
    %c0_i32_1 = arith.constant 0 : i32
    return %c0_i32, %c0_i32_0 : i32, i32
  }
  func.func @transform_2(%arg0: i32) -> (i32, i32) {
    %c0_i32 = arith.constant 0 : i32
    %c0_i32_0 = arith.constant 0 : i32
    %c0_i32_1 = arith.constant 0 : i32
    return %c0_i32, %c0_i32_0 : i32, i32
  }
  func.func @transform_3(%arg0: i32) -> (i32, i32) {
    %c0_i32 = arith.constant 0 : i32
    %c0_i32_0 = arith.constant 0 : i32
    %c0_i32_1 = arith.constant 0 : i32
    return %c0_i32, %c0_i32_0 : i32, i32
  }
  func.func @transform_4(%arg0: i32) -> (i32, i32) {
    %c0_i32 = arith.constant 0 : i32
    %c0_i32_0 = arith.constant 0 : i32
    %c0_i32_1 = arith.constant 0 : i32
    return %c0_i32, %c0_i32_0 : i32, i32
  }
  func.func @transform_5(%arg0: i32) -> (i32, i32) {
    %c0_i32 = arith.constant 0 : i32
    %c0_i32_0 = arith.constant 0 : i32
    %c0_i32_1 = arith.constant 0 : i32
    return %c0_i32, %c0_i32_0 : i32, i32
  }
  func.func @transform_6(%arg0: i32) -> (i32, i32) {
    %c0_i32 = arith.constant 0 : i32
    %c0_i32_0 = arith.constant 0 : i32
    %c0_i32_1 = arith.constant 0 : i32
    return %c0_i32, %c0_i32_0 : i32, i32
  }
  func.func @transform_7(%arg0: i32) -> (i32, i32) {
    %c0_i32 = arith.constant 0 : i32
    %c0_i32_0 = arith.constant 0 : i32
    return %arg0, %c0_i32 : i32, i32
  }
}

</mosaic_0001>

<llo_original>
// kernel: tpu_custom_call.1
$region0: #{tpu_custom_call.1}
  #allocation0 [shape = 'u32[]', space=smem, size = 0x4, offset = 0x4, fixed_abs, tag = 'smem constant byte address 0x4 - core index']
  #allocation1 [shape = 'u32[72,128]{1,0:T(1,128)}', space=vmem, size = 0x9000, scoped, tag = 'internal scratch']
  %s0 = inlined_call_operand.hbm [shape: f32[8,50], index: 0, kind: input, shape index: {}]
  %s1 = inlined_call_operand.vmem [shape: f32[50,128], index: 1, kind: input, shape index: {}]
  %s2 = inlined_call_operand.vmem [shape: f32[1,128], index: 2, kind: input, shape index: {}]
  %s3 = inlined_call_operand.vmem [shape: f32[128,128], index: 3, kind: input, shape index: {}]
  %s4 = inlined_call_operand.vmem [shape: f32[1,128], index: 4, kind: input, shape index: {}]
  %s5 = inlined_call_operand.vmem [shape: f32[128,50], index: 5, kind: input, shape index: {}]
  %s6 = inlined_call_operand.vmem [shape: f32[1,50], index: 6, kind: input, shape index: {}]
  %s7 = inlined_call_operand.hbm [shape: f32[8,50], index: 7, kind: output, shape index: {}]
  %s8 = sld [smem:[#allocation0]]
  $region42: #{tpu_custom_call.1} parent=0
    _
  %s10 = ssub.s32 1, %s8
  %s11 = scalar_select 0, %s10, %s8
  $region1: #{tpu_custom_call.1} parent=0
    #allocation2 [shape = 'u8[4096]{0}', space=vmem, size = 0x1000, scoped, tag = 'input window, operand 0, single buffered']
    #allocation3 [shape = 's32[1]{0}', space=sflag, size = 0x4, scoped, tag = 'scoped memory for tpu_custom_call.1']
    #allocation4 [shape = 's32[1]{0}', space=sflag, size = 0x4, scoped, tag = 'scoped memory for tpu_custom_call.1']
    #allocation5 [shape = 'u8[4096]{0}', space=vmem, size = 0x1000, scoped, tag = 'output window, operand 0, single buffered']
    %12 = vsyncpa [#allocation3], 0
    %13 = vsyncpa [#allocation4], 0
    // Predicated region
    $region2: #{tpu_custom_call.1} parent=1 // pred_check
      _
    $region3: #{tpu_custom_call.1} parent=1 // pred_check_branch
      %15 = sbr.rel (0) target = $region5
    $region4: #{tpu_custom_call.1} parent=1 // pred_region
      %17 = vsyncadd [#allocation3], 0
      %s19 = sshll.u32 %s0, 4
      %s20 = int_to_ptr.hbm [resolvable:$true] %s19
      %s21 = sshll.u32 [#allocation2], 4
      %s22 = int_to_ptr.vmem [resolvable:$true] %s21
      %24 = dma.hbm_to_vmem [thread:$0]  %s20, 128, %s22, [#allocation3]
    $region5: #{tpu_custom_call.1} parent=1 // pred_fallthru
      _
    // Predicated region
    $region6: #{tpu_custom_call.1} parent=1 // pred_check
      _
    $region7: #{tpu_custom_call.1} parent=1 // pred_check_branch
      %26 = sbr.rel (0) target = $region9
    $region8: #{tpu_custom_call.1} parent=1 // pred_region
      _
    $region9: #{tpu_custom_call.1} parent=1 // pred_fallthru
      _
    // Predicated region
    $region10: #{tpu_custom_call.1} parent=1 // pred_check
      _
    $region11: #{tpu_custom_call.1} parent=1 // pred_check_branch
      %28 = sbr.rel (0) target = $region13
    $region12: #{tpu_custom_call.1} parent=1 // pred_region
      _
    $region13: #{tpu_custom_call.1} parent=1 // pred_fallthru
      _
    // Predicated region
    $region14: #{tpu_custom_call.1} parent=1 // pred_check
      _
    $region15: #{tpu_custom_call.1} parent=1 // pred_check_branch
      %30 = sbr.rel (0) target = $region17
    $region16: #{tpu_custom_call.1} parent=1 // pred_region
      _
    $region17: #{tpu_custom_call.1} parent=1 // pred_fallthru
      _
    // Predicated region
    $region18: #{tpu_custom_call.1} parent=1 // pred_check
      _
    $region19: #{tpu_custom_call.1} parent=1 // pred_check_branch
      %32 = sbr.rel (0) target = $region21
    $region20: #{tpu_custom_call.1} parent=1 // pred_region
      _
    $region21: #{tpu_custom_call.1} parent=1 // pred_fallthru
      _
    // Predicated region
    $region22: #{tpu_custom_call.1} parent=1 // pred_check
      _
    $region23: #{tpu_custom_call.1} parent=1 // pred_check_branch
      %34 = sbr.rel (0) target = $region25
    $region24: #{tpu_custom_call.1} parent=1 // pred_region
      _
    $region25: #{tpu_custom_call.1} parent=1 // pred_fallthru
      _
    // Predicated region
    $region26: #{tpu_custom_call.1} parent=1 // pred_check
      _
    $region27: #{tpu_custom_call.1} parent=1 // pred_check_branch
      %36 = sbr.rel (0) target = $region29
    $region28: #{tpu_custom_call.1} parent=1 // pred_region
      _
    $region29: #{tpu_custom_call.1} parent=1 // pred_fallthru
      _
    // Predicated region
    $region30: #{tpu_custom_call.1} parent=1 // pred_check
      _
    $region31: #{tpu_custom_call.1} parent=1 // pred_check_branch
      %38 = sbr.rel (0) target = $region33
    $region32: #{tpu_custom_call.1} parent=1 // pred_region
      %40 = dma.done [#allocation3], 128
    $region33: #{tpu_custom_call.1} parent=1 // pred_fallthru
      _
    %v41 = vld [vmem:[#allocation2] sm:$0xff]
    %v42 = vld [vmem:[%s1] sm:$0xff]
    %v43 = vld [vmem:[%s1 + $0x8] sm:$0xff]
    %v44 = vld [vmem:[%s1 + $0x10] sm:$0xff]
    %v45 = vld [vmem:[%s1 + $0x18] sm:$0xff]
    %v46 = vld [vmem:[%s1 + $0x20] sm:$0xff]
    %v47 = vld [vmem:[%s1 + $0x28] sm:$0xff]
    %v48 = vld [vmem:[%s1 + $0x30] sm:$0x3]
    %v49 = vld [vmem:[%s2] sm:$0x1]
    %v51 = vperm.slane %v49, 0
    %vm53 = vcmask 408576
    %v55 = vsel %vm53, %v41, 0
    %vm57 = vcmask 1041408
    %v59 = vsel %vm57, %v48, 0
    %61 = vmatpush.msra.mxu0 0.0
    %62 = vmatpush.msra.mxu0 0.0
    %63 = vmatpush.msra.mxu0 0.0
    %64 = vmatpush.msra.mxu0 0.0
    %65 = vmatpush.msra.mxu0 0.0
    %66 = vmatpush.msra.mxu0 0.0
    %67 = vmatpush.msra.mxu0 0.0
    %68 = vmatpush.msra.mxu0 0.0
    %69 = vmatpush.msra.mxu0 0.0
    %70 = vmatpush.msra.mxu0 %v59
    %71 = vmatpush.msra.mxu0 %v47
    %72 = vmatpush.msra.mxu0 %v46
    %73 = vmatpush.msra.mxu0 %v45
    %74 = vmatpush.msra.mxu0 %v44
    %75 = vmatpush.msra.mxu0 %v43
    %76 = vmatpush.msra.mxu0 %v42
    %77 = vmatmul.f32.gmra.mxu0 %v55
    %v78 = vpop.f32.mrf.mxu0
    %v79 = vadd.f32 %v51, %v78
    %80 = vdwg.mxu0
    %v81 = vmax.f32 %v79, 0.0
    %v82 = vld [vmem:[%s3] sm:$0xff]
    %v83 = vld [vmem:[%s3 + $0x8] sm:$0xff]
    %v84 = vld [vmem:[%s3 + $0x10] sm:$0xff]
    %v85 = vld [vmem:[%s3 + $0x18] sm:$0xff]
    %v86 = vld [vmem:[%s3 + $0x20] sm:$0xff]
    %v87 = vld [vmem:[%s3 + $0x28] sm:$0xff]
    %v88 = vld [vmem:[%s3 + $0x30] sm:$0xff]
    %v89 = vld [vmem:[%s3 + $0x38] sm:$0xff]
    %v90 = vld [vmem:[%s3 + $0x40] sm:$0xff]
    %v91 = vld [vmem:[%s3 + $0x48] sm:$0xff]
    %v92 = vld [vmem:[%s3 + $0x50] sm:$0xff]
    %v93 = vld [vmem:[%s3 + $0x58] sm:$0xff]
    %v94 = vld [vmem:[%s3 + $0x60] sm:$0xff]
    %v95 = vld [vmem:[%s3 + $0x68] sm:$0xff]
    %v96 = vld [vmem:[%s3 + $0x70] sm:$0xff]
    %v97 = vld [vmem:[%s3 + $0x78] sm:$0xff]
    %v98 = vld [vmem:[%s4] sm:$0x1]
    %v100 = vperm.slane %v98, 0
    %102 = vmatpush.msra.mxu0 %v97
    %103 = vmatpush.msra.mxu0 %v96
    %104 = vmatpush.msra.mxu0 %v95
    %105 = vmatpush.msra.mxu0 %v94
    %106 = vmatpush.msra.mxu0 %v93
    %107 = vmatpush.msra.mxu0 %v92
    %108 = vmatpush.msra.mxu0 %v91
    %109 = vmatpush.msra.mxu0 %v90
    %110 = vmatpush.msra.mxu0 %v89
    %111 = vmatpush.msra.mxu0 %v88
    %112 = vmatpush.msra.mxu0 %v87
    %113 = vmatpush.msra.mxu0 %v86
    %114 = vmatpush.msra.mxu0 %v85
    %115 = vmatpush.msra.mxu0 %v84
    %116 = vmatpush.msra.mxu0 %v83
    %117 = vmatpush.msra.mxu0 %v82
    %118 = vmatmul.f32.gmra.mxu0 %v81
    %v119 = vpop.f32.mrf.mxu0
    %v120 = vadd.f32 %v100, %v119
    %121 = vdwg.mxu0
    %v122 = vmax.f32 %v120, 0.0
    %v123 = vld [vmem:[%s5] sm:$0xff]
    %v124 = vld [vmem:[%s5 + $0x8] sm:$0xff]
    %v125 = vld [vmem:[%s5 + $0x10] sm:$0xff]
    %v126 = vld [vmem:[%s5 + $0x18] sm:$0xff]
    %v127 = vld [vmem:[%s5 + $0x20] sm:$0xff]
    %v128 = vld [vmem:[%s5 + $0x28] sm:$0xff]
    %v129 = vld [vmem:[%s5 + $0x30] sm:$0xff]
    %v130 = vld [vmem:[%s5 + $0x38] sm:$0xff]
    %v131 = vld [vmem:[%s5 + $0x40] sm:$0xff]
    %v132 = vld [vmem:[%s5 + $0x48] sm:$0xff]
    %v133 = vld [vmem:[%s5 + $0x50] sm:$0xff]
    %v134 = vld [vmem:[%s5 + $0x58] sm:$0xff]
    %v135 = vld [vmem:[%s5 + $0x60] sm:$0xff]
    %v136 = vld [vmem:[%s5 + $0x68] sm:$0xff]
    %v137 = vld [vmem:[%s5 + $0x70] sm:$0xff]
    %v138 = vld [vmem:[%s5 + $0x78] sm:$0xff]
    %v139 = vld [vmem:[%s6] sm:$0x1]
    %v141 = vperm.slane %v139, 0
    %143 = vmatpush.msra.mxu0 %v138
    %144 = vmatpush.msra.mxu0 %v137
    %145 = vmatpush.msra.mxu0 %v136
    %146 = vmatpush.msra.mxu0 %v135
    %147 = vmatpush.msra.mxu0 %v134
    %148 = vmatpush.msra.mxu0 %v133
    %149 = vmatpush.msra.mxu0 %v132
    %150 = vmatpush.msra.mxu0 %v131
    %151 = vmatpush.msra.mxu0 %v130
    %152 = vmatpush.msra.mxu0 %v129
    %153 = vmatpush.msra.mxu0 %v128
    %154 = vmatpush.msra.mxu0 %v127
    %155 = vmatpush.msra.mxu0 %v126
    %156 = vmatpush.msra.mxu0 %v125
    %157 = vmatpush.msra.mxu0 %v124
    %158 = vmatpush.msra.mxu0 %v123
    %159 = vmatmul.f32.gmra.mxu0 %v122
    %v160 = vpop.f32.mrf.mxu0
    %v161 = vadd.f32 %v141, %v160
    %162 = vdwg.mxu0
    %163 = vst.msk [vmem:[#allocation5] sm:$0xff] %vm53, %v161
    // Predicated region
    $region34: #{tpu_custom_call.1} parent=1 // pred_check
      _
    $region35: #{tpu_custom_call.1} parent=1 // pred_check_branch
      %165 = sbr.rel (0) target = $region37
    $region36: #{tpu_custom_call.1} parent=1 // pred_region
      %167 = vsyncadd [#allocation4], 0
      %s169 = sshll.u32 [#allocation5], 4
      %s170 = int_to_ptr.vmem [resolvable:$true] %s169
      %s171 = sshll.u32 %s7, 4
      %s172 = int_to_ptr.hbm [resolvable:$true] %s171
      %174 = dma.vmem_to_hbm [thread:$0]  %s170, 128, %s172, [#allocation4]
    $region37: #{tpu_custom_call.1} parent=1 // pred_fallthru
      _
    // Predicated region
    $region38: #{tpu_custom_call.1} parent=1 // pred_check
      _
    $region39: #{tpu_custom_call.1} parent=1 // pred_check_branch
      %176 = sbr.rel (0) target = $region41
    $region40: #{tpu_custom_call.1} parent=1 // pred_region
      %178 = dma.done [#allocation4], 128
    $region41: #{tpu_custom_call.1} parent=1 // pred_fallthru
      _
    %179 = vsyncpa [#allocation3], 1
    %180 = vsyncpa [#allocation4], 1

</llo_original>
